<compile_context>
chip_gen: v5e
topology: v5e:2x2
jax: 0.10.0
libtpu: 0.0.40
codegen_flags: <defaults>
</compile_context>

<pallas_src>
import functools

import jax
import jax.numpy as jnp
import numpy as np
from jax.experimental import pallas as pl
from jax.experimental.pallas import tpu as pltpu

_MAX_BATCH_TILE = 2048  # rows per grid step; ~12-14 MiB/step incl. double buffers -> fits v7x


def _round_up(x, m):
    return -(-x // m) * m


# ---------------------------------------------------------------------------
# Fused Pallas kernel: conv1 + conv2 (as dense matmuls) + fused FC heads
# ---------------------------------------------------------------------------

def _encoder_fused_kernel(x_ref, d1_ref, b1_ref, d2_ref, b2_ref, wh_ref, bh_ref, o_ref):
    """One batch tile of the full encoder.

    x:(BT,196) bf16   d1:(196,512) bf16   d2:(512,256) bf16   wh:(256,128) bf16
    biases are (1,N) f32.  Matmuls accumulate in f32; bias/ReLU in f32.
    """
    h1 = jnp.maximum(
        jnp.dot(x_ref[...], d1_ref[...], preferred_element_type=jnp.float32) + b1_ref[...],
        0.0)
    h2 = jnp.maximum(
        jnp.dot(h1.astype(jnp.bfloat16), d2_ref[...],
                preferred_element_type=jnp.float32) + b2_ref[...],
        0.0)
    o_ref[...] = (
        jnp.dot(h2.astype(jnp.bfloat16), wh_ref[...],
                preferred_element_type=jnp.float32) + bh_ref[...]
    ).astype(o_ref.dtype)


# ---------------------------------------------------------------------------
# One-time weight preprocessing (host side / numpy, data-independent)
# ---------------------------------------------------------------------------

def _conv_as_dense_np(w, in_h, in_w, stride, pad):
    """Expand Conv2d weight (OC,IC,KH,KW) into dense D of shape (IC*H*W, OC*OH*OW)
    such that conv2d(x, w) flattened NCHW == x_flat @ D.  Pure host-side indexing."""
    w = np.asarray(w, dtype=np.float32)
    oc, ic, kh, kw = w.shape
    oh = (in_h + 2 * pad - kh) // stride + 1
    ow = (in_w + 2 * pad - kw) // stride + 1
    oc_i, ic_i, kh_i, kw_i, oh_i, ow_i = np.meshgrid(
        np.arange(oc), np.arange(ic), np.arange(kh), np.arange(kw),
        np.arange(oh), np.arange(ow), indexing="ij")
    ih = stride * oh_i + kh_i - pad
    iw = stride * ow_i + kw_i - pad
    valid = (ih >= 0) & (ih < in_h) & (iw >= 0) & (iw < in_w)
    dense = np.zeros((ic, in_h, in_w, oc, oh, ow), dtype=np.float32)
    np.add.at(
        dense,
        (ic_i[valid], ih[valid], iw[valid], oc_i[valid], oh_i[valid], ow_i[valid]),
        w[oc_i[valid], ic_i[valid], kh_i[valid], kw_i[valid]])
    return dense.reshape(ic * in_h * in_w, oc * oh * ow), oh, ow


def preprocess_params(params, in_h=14, in_w=14):
    """Run ONCE per parameter set (outside the training-step hot path)."""
    c_in = params["conv1_w"].shape[1]
    d1, oh1, ow1 = _conv_as_dense_np(params["conv1_w"], in_h, in_w, stride=2, pad=1)
    d2, oh2, ow2 = _conv_as_dense_np(params["conv2_w"], oh1, ow1, stride=2, pad=1)
    b1f = np.repeat(np.asarray(params["conv1_b"], np.float32), oh1 * ow1)[None, :]
    b2f = np.repeat(np.asarray(params["conv2_b"], np.float32), oh2 * ow2)[None, :]
    # fused fc_mu / fc_logvar head
    wh = np.concatenate([np.asarray(params["fc_mu_w"], np.float32).T,
                         np.asarray(params["fc_logvar_w"], np.float32).T], axis=1)
    bh = np.concatenate([np.asarray(params["fc_mu_b"], np.float32),
                         np.asarray(params["fc_logvar_b"], np.float32)])[None, :]

    k1 = c_in * in_h * in_w                    # 196
    n1 = d1.shape[1]                           # 392
    n2 = d2.shape[1]                           # 256
    nh = wh.shape[1]                           # 2 * latent
    n1p = _round_up(max(n1, 128), 128)         # 392 -> 512 (lane-aligned h1)
    nhp = _round_up(max(nh, 128), 128)         # 2*latent -> 128 (unmasked stores)
    assert n2 == params["fc_mu_w"].shape[1], "conv output does not match fc in-features"

    d1p = np.zeros((k1, n1p), np.float32); d1p[:, :n1] = d1
    b1p = np.zeros((1, n1p), np.float32);  b1p[:, :n1] = b1f
    d2p = np.zeros((n1p, n2), np.float32); d2p[:n1, :] = d2
    whp = np.zeros((n2, nhp), np.float32); whp[:, :nh] = wh
    bhp = np.zeros((1, nhp), np.float32);  bhp[:, :nh] = bh

    return {
        "d1": jnp.asarray(d1p, jnp.bfloat16),   # MXU operands in bf16
        "b1": jnp.asarray(b1p, jnp.float32),
        "d2": jnp.asarray(d2p, jnp.bfloat16),
        "b2": jnp.asarray(b2f, jnp.float32),
        "wh": jnp.asarray(whp, jnp.bfloat16),
        "bh": jnp.asarray(bhp, jnp.float32),
    }


# ---------------------------------------------------------------------------
# Encoder forward (matches the PyTorch module semantics)
# ---------------------------------------------------------------------------

def encoder_forward(x, consts, latent_dim):
    """x: (B, 1, 14, 14) float32 NCHW. consts: output of preprocess_params.
    Returns (mu, logvar), each (B, latent_dim)."""
    b = x.shape[0]
    k1 = consts["d1"].shape[0]
    n1p = consts["d1"].shape[1]
    n2 = consts["d2"].shape[1]
    nhp = consts["wh"].shape[1]

    x_flat = x.reshape(b, -1).astype(jnp.bfloat16)   # == torch x.view(B,-1) on NCHW
    assert x_flat.shape[1] == k1

    # --- batch tiling: balanced tiles, >=2 grid steps for megacore when batch allows ---
    num_tiles = max(1, -(-b // _MAX_BATCH_TILE))
    if b >= 32:
        num_tiles = max(num_tiles, 2)        # v7x: both TensorCores get a grid step
    bt = _round_up(-(-b // num_tiles), 16)   # 16: bf16 sublane packing
    b_pad = _round_up(b, bt)
    if b_pad != b:
        x_flat = jnp.pad(x_flat, ((0, b_pad - b), (0, 0)))

    const = lambda i: (0, 0)                 # weights: DMA'd once, VMEM-resident
    out = pl.pallas_call(
        _encoder_fused_kernel,
        out_shape=jax.ShapeDtypeStruct((b_pad, nhp), jnp.float32),
        grid=(b_pad // bt,),
        in_specs=[
            pl.BlockSpec((bt, k1), lambda i: (i, 0)),   # activations (pipelined)
            pl.BlockSpec((k1, n1p), const),             # conv1 as dense (bf16)
            pl.BlockSpec((1, n1p), const),
            pl.BlockSpec((n1p, n2), const),             # conv2 as dense (bf16)
            pl.BlockSpec((1, n2), const),
            pl.BlockSpec((n2, nhp), const),             # fused fc heads (bf16)
            pl.BlockSpec((1, nhp), const),
        ],
        out_specs=pl.BlockSpec((bt, nhp), lambda i: (i, 0)),
        compiler_params=pltpu.CompilerParams(dimension_semantics=("parallel",)),
    )(x_flat, consts["d1"], consts["b1"], consts["d2"], consts["b2"],
      consts["wh"], consts["bh"])

    out = out[:b]
    return out[:, :latent_dim], out[:, latent_dim:2 * latent_dim]


# ---------------------------------------------------------------------------
# Pure-JAX reference + init (for the self-check)
# ---------------------------------------------------------------------------

def encoder_reference(x, params):
    dn = ("NCHW", "OIHW", "NCHW")
    y = jax.lax.conv_general_dilated(x, params["conv1_w"], (2, 2),
                                     ((1, 1), (1, 1)), dimension_numbers=dn)
    y = jax.nn.relu(y + params["conv1_b"][None, :, None, None])
    y = jax.lax.conv_general_dilated(y, params["conv2_w"], (2, 2),
                                     ((1, 1), (1, 1)), dimension_numbers=dn)
    y = jax.nn.relu(y + params["conv2_b"][None, :, None, None])
    y = y.reshape(y.shape[0], -1)
    mu = y @ params["fc_mu_w"].T + params["fc_mu_b"]
    logvar = y @ params["fc_logvar_w"].T + params["fc_logvar_b"]
    return mu, logvar


def init_params(key, latent_dim):
    ks = jax.random.split(key, 8)
    return {
        # PyTorch layouts: Conv2d (OC, IC, KH, KW), Linear (out, in)
        "conv1_w": 0.1 * jax.random.normal(ks[0], (8, 1, 3, 3), jnp.float32),
        "conv1_b": 0.1 * jax.random.normal(ks[1], (8,), jnp.float32),
        "conv2_w": 0.1 * jax.random.normal(ks[2], (16, 8, 3, 3), jnp.float32),
        "conv2_b": 0.1 * jax.random.normal(ks[3], (16,), jnp.float32),
        "fc_mu_w": 0.05 * jax.random.normal(ks[4], (latent_dim, 256), jnp.float32),
        "fc_mu_b": 0.05 * jax.random.normal(ks[5], (latent_dim,), jnp.float32),
        "fc_logvar_w": 0.05 * jax.random.normal(ks[6], (latent_dim, 256), jnp.float32),
        "fc_logvar_b": 0.05 * jax.random.normal(ks[7], (latent_dim,), jnp.float32),
    }


if __name__ == "__main__":
    latent_dim = 8
    batch = 2

    key = jax.random.PRNGKey(0)
    k_params, k_x = jax.random.split(key)
    params = init_params(k_params, latent_dim)

    # One-time host-side layout work (hoisted out of the per-call hot path).
    consts = preprocess_params(params, in_h=14, in_w=14)

    # 14x14 single-channel "Even MNIST" images -> conv features flatten to 16*4*4=256.
    x = jax.random.normal(k_x, (batch, 1, 14, 14), jnp.float32)

    fwd = jax.jit(functools.partial(encoder_forward, latent_dim=latent_dim))
    mu, logvar = fwd(x, consts)
    jax.block_until_ready((mu, logvar))

    assert mu.shape == (batch, latent_dim)
    assert logvar.shape == (batch, latent_dim)

    mu_ref, logvar_ref = encoder_reference(x, params)
    np.testing.assert_allclose(np.asarray(mu), np.asarray(mu_ref), rtol=1e-2, atol=1e-2)
    np.testing.assert_allclose(np.asarray(logvar), np.asarray(logvar_ref), rtol=1e-2, atol=1e-2)
    print("KERNEL_OK")
</pallas_src>

<mosaic_0001>
module attributes {stable_mosaic.version = 11 : i64} {
  func.func @_encoder_fused_kernel(%arg0: i32, %arg1: memref<16x196xbf16, #tpu.memory_space<vmem>>, %arg2: memref<196x512xbf16, #tpu.memory_space<vmem>>, %arg3: memref<1x512xf32, #tpu.memory_space<vmem>>, %arg4: memref<512x256xbf16, #tpu.memory_space<vmem>>, %arg5: memref<1x256xf32, #tpu.memory_space<vmem>>, %arg6: memref<256x128xbf16, #tpu.memory_space<vmem>>, %arg7: memref<1x128xf32, #tpu.memory_space<vmem>>, %arg8: memref<16x128xf32, #tpu.memory_space<vmem>>) attributes {dimension_semantics = [#tpu.dimension_semantics<parallel>], iteration_bounds = array<i64: 1>, scalar_prefetch = 0 : i64, scratch_operands = 0 : i64, tpu.core_type = #tpu.core_type<tc>, window_params = [{transform_indices = @transform_0, window_bounds = array<i64: 16, 196>}, {pipeline_mode = #tpu.pipeline_mode<synchronous>, transform_indices = @transform_1, window_bounds = array<i64: 196, 512>}, {pipeline_mode = #tpu.pipeline_mode<synchronous>, transform_indices = @transform_2, window_bounds = array<i64: 1, 512>}, {pipeline_mode = #tpu.pipeline_mode<synchronous>, transform_indices = @transform_3, window_bounds = array<i64: 512, 256>}, {pipeline_mode = #tpu.pipeline_mode<synchronous>, transform_indices = @transform_4, window_bounds = array<i64: 1, 256>}, {pipeline_mode = #tpu.pipeline_mode<synchronous>, transform_indices = @transform_5, window_bounds = array<i64: 256, 128>}, {pipeline_mode = #tpu.pipeline_mode<synchronous>, transform_indices = @transform_6, window_bounds = array<i64: 1, 128>}, {transform_indices = @transform_7, window_bounds = array<i64: 16, 128>}]} {
    %c0 = arith.constant 0 : index
    %c0_0 = arith.constant 0 : index
    %0 = vector.load %arg1[%c0, %c0_0] : memref<16x196xbf16, #tpu.memory_space<vmem>>, vector<16x196xbf16>
    %c0_1 = arith.constant 0 : index
    %c0_2 = arith.constant 0 : index
    %1 = vector.load %arg2[%c0_1, %c0_2] : memref<196x512xbf16, #tpu.memory_space<vmem>>, vector<196x512xbf16>
    %cst = arith.constant dense<0.000000e+00> : vector<16x512xf32>
    %2 = tpu.matmul %0, %1, %cst {dimension_numbers = #tpu.dot_dimension_numbers<[1], [0], [0], [1], [0, 0, 1, 1], [], []>} : vector<16x196xbf16>, vector<196x512xbf16>, vector<16x512xf32> -> vector<16x512xf32>
    %c0_3 = arith.constant 0 : index
    %c0_4 = arith.constant 0 : index
    %3 = vector.load %arg3[%c0_3, %c0_4] : memref<1x512xf32, #tpu.memory_space<vmem>>, vector<1x512xf32>
    %4 = vector.broadcast %3 : vector<1x512xf32> to vector<16x512xf32>
    %5 = arith.addf %2, %4 : vector<16x512xf32>
    %cst_5 = arith.constant 0.000000e+00 : f32
    %6 = vector.broadcast %cst_5 : f32 to vector<16x512xf32>
    %7 = arith.maximumf %5, %6 : vector<16x512xf32>
    %8 = arith.truncf %7 : vector<16x512xf32> to vector<16x512xbf16>
    %c0_6 = arith.constant 0 : index
    %c0_7 = arith.constant 0 : index
    %9 = vector.load %arg4[%c0_6, %c0_7] : memref<512x256xbf16, #tpu.memory_space<vmem>>, vector<512x256xbf16>
    %cst_8 = arith.constant dense<0.000000e+00> : vector<16x256xf32>
    %10 = tpu.matmul %8, %9, %cst_8 {dimension_numbers = #tpu.dot_dimension_numbers<[1], [0], [0], [1], [0, 0, 1, 1], [], []>} : vector<16x512xbf16>, vector<512x256xbf16>, vector<16x256xf32> -> vector<16x256xf32>
    %c0_9 = arith.constant 0 : index
    %c0_10 = arith.constant 0 : index
    %11 = vector.load %arg5[%c0_9, %c0_10] : memref<1x256xf32, #tpu.memory_space<vmem>>, vector<1x256xf32>
    %12 = vector.broadcast %11 : vector<1x256xf32> to vector<16x256xf32>
    %13 = arith.addf %10, %12 : vector<16x256xf32>
    %cst_11 = arith.constant 0.000000e+00 : f32
    %14 = vector.broadcast %cst_11 : f32 to vector<16x256xf32>
    %15 = arith.maximumf %13, %14 : vector<16x256xf32>
    %16 = arith.truncf %15 : vector<16x256xf32> to vector<16x256xbf16>
    %c0_12 = arith.constant 0 : index
    %c0_13 = arith.constant 0 : index
    %17 = vector.load %arg6[%c0_12, %c0_13] : memref<256x128xbf16, #tpu.memory_space<vmem>>, vector<256x128xbf16>
    %cst_14 = arith.constant dense<0.000000e+00> : vector<16x128xf32>
    %18 = tpu.matmul %16, %17, %cst_14 {dimension_numbers = #tpu.dot_dimension_numbers<[1], [0], [0], [1], [0, 0, 1, 1], [], []>} : vector<16x256xbf16>, vector<256x128xbf16>, vector<16x128xf32> -> vector<16x128xf32>
    %c0_15 = arith.constant 0 : index
    %c0_16 = arith.constant 0 : index
    %19 = vector.load %arg7[%c0_15, %c0_16] : memref<1x128xf32, #tpu.memory_space<vmem>>, vector<1x128xf32>
    %20 = vector.broadcast %19 : vector<1x128xf32> to vector<16x128xf32>
    %21 = arith.addf %18, %20 : vector<16x128xf32>
    %c0_17 = arith.constant 0 : index
    %c0_18 = arith.constant 0 : index
    %22 = vector.load %arg8[%c0_17, %c0_18] : memref<16x128xf32, #tpu.memory_space<vmem>>, vector<16x128xf32>
    tpu.vector_store %arg8[%c0_17, %c0_18], %21 {strides = array<i32>} : memref<16x128xf32, #tpu.memory_space<vmem>>, vector<16x128xf32>,
    return
  }
  func.func @transform_0(%arg0: i32) -> (i32, i32) {
    %c0_i32 = arith.constant 0 : i32
    %c0_i32_0 = arith.constant 0 : i32
    return %arg0, %c0_i32 : i32, i32
  }
  func.func @transform_1(%arg0: i32) -> (i32, i32) {
    %c0_i32 = arith.constant 0 : i32
    %c0_i32_0 = arith.constant 0 : i32
    %c0_i32_1 = arith.constant 0 : i32
    return %c0_i32, %c0_i32_0 : i32, i32
  }
  func.func @transform_2(%arg0: i32) -> (i32, i32) {
    %c0_i32 = arith.constant 0 : i32
    %c0_i32_0 = arith.constant 0 : i32
    %c0_i32_1 = arith.constant 0 : i32
    return %c0_i32, %c0_i32_0 : i32, i32
  }
  func.func @transform_3(%arg0: i32) -> (i32, i32) {
    %c0_i32 = arith.constant 0 : i32
    %c0_i32_0 = arith.constant 0 : i32
    %c0_i32_1 = arith.constant 0 : i32
    return %c0_i32, %c0_i32_0 : i32, i32
  }
  func.func @transform_4(%arg0: i32) -> (i32, i32) {
    %c0_i32 = arith.constant 0 : i32
    %c0_i32_0 = arith.constant 0 : i32
    %c0_i32_1 = arith.constant 0 : i32
    return %c0_i32, %c0_i32_0 : i32, i32
  }
  func.func @transform_5(%arg0: i32) -> (i32, i32) {
    %c0_i32 = arith.constant 0 : i32
    %c0_i32_0 = arith.constant 0 : i32
    %c0_i32_1 = arith.constant 0 : i32
    return %c0_i32, %c0_i32_0 : i32, i32
  }
  func.func @transform_6(%arg0: i32) -> (i32, i32) {
    %c0_i32 = arith.constant 0 : i32
    %c0_i32_0 = arith.constant 0 : i32
    %c0_i32_1 = arith.constant 0 : i32
    return %c0_i32, %c0_i32_0 : i32, i32
  }
  func.func @transform_7(%arg0: i32) -> (i32, i32) {
    %c0_i32 = arith.constant 0 : i32
    %c0_i32_0 = arith.constant 0 : i32
    return %arg0, %c0_i32 : i32, i32
  }
}

</mosaic_0001>

<llo_original>
// kernel: encoder_forward.1
$region0: #{encoder_forward.1}
  #allocation0 [shape = 'u32[]', space=smem, size = 0x4, offset = 0x4, fixed_abs, tag = 'smem constant byte address 0x4 - core index']
  #allocation1 [shape = 'u32[72,128]{1,0:T(1,128)}', space=vmem, size = 0x9000, scoped, tag = 'internal scratch']
  %s0 = inlined_call_operand.vmem [shape: bf16[16,196], index: 0, kind: input, shape index: {}]
  %s1 = inlined_call_operand.hbm [shape: bf16[196,512], index: 1, kind: input, shape index: {}]
  %s2 = inlined_call_operand.vmem [shape: f32[1,512], index: 2, kind: input, shape index: {}]
  %s3 = inlined_call_operand.hbm [shape: bf16[512,256], index: 3, kind: input, shape index: {}]
  %s4 = inlined_call_operand.vmem [shape: f32[1,256], index: 4, kind: input, shape index: {}]
  %s5 = inlined_call_operand.hbm [shape: bf16[256,128], index: 5, kind: input, shape index: {}]
  %s6 = inlined_call_operand.vmem [shape: f32[1,128], index: 6, kind: input, shape index: {}]
  %s7 = inlined_call_operand.vmem [shape: f32[16,128], index: 7, kind: output, shape index: {}]
  %s8 = sld [smem:[#allocation0]]
  $region50: #{encoder_forward.1} parent=0
    _
  %s10 = ssub.s32 1, %s8
  %s11 = scalar_select 0, %s10, %s8
  $region1: #{encoder_forward.1} parent=0
    #allocation2 [shape = 'u8[204800]{0}', space=vmem, size = 0x32000, scoped, tag = 'input window, operand 1, single buffered']
    #allocation3 [shape = 's32[1]{0}', space=sflag, size = 0x4, scoped, tag = 'scoped memory for encoder_forward.1']
    #allocation4 [shape = 'u8[262144]{0}', space=vmem, size = 0x40000, scoped, tag = 'input window, operand 3, single buffered']
    #allocation5 [shape = 's32[1]{0}', space=sflag, size = 0x4, scoped, tag = 'scoped memory for encoder_forward.1']
    #allocation6 [shape = 'u8[65536]{0}', space=vmem, size = 0x10000, scoped, tag = 'input window, operand 5, single buffered']
    %12 = vsyncpa [#allocation3], 0
    %13 = vsyncpa [#allocation5], 0
    // Predicated region
    $region2: #{encoder_forward.1} parent=1 // pred_check
      _
    $region3: #{encoder_forward.1} parent=1 // pred_check_branch
      %15 = sbr.rel (0) target = $region5
    $region4: #{encoder_forward.1} parent=1 // pred_region
      _
    $region5: #{encoder_forward.1} parent=1 // pred_fallthru
      _
    // Predicated region
    $region6: #{encoder_forward.1} parent=1 // pred_check
      _
    $region7: #{encoder_forward.1} parent=1 // pred_check_branch
      %17 = sbr.rel (0) target = $region9
    $region8: #{encoder_forward.1} parent=1 // pred_region
      %19 = vsyncadd [#allocation3], 0
      %s20 = sshll.u32 %s1, 4
      %s21 = int_to_ptr.hbm [resolvable:$true] %s20
      %s22 = sshll.u32 [#allocation2], 4
      %s23 = int_to_ptr.vmem [resolvable:$true] %s22
      %28 = dma.hbm_to_vmem [thread:$0]  %s21, 6400, %s23, [#allocation3], 256, 256, 16
    $region9: #{encoder_forward.1} parent=1 // pred_fallthru
      _
    // Predicated region
    $region10: #{encoder_forward.1} parent=1 // pred_check
      _
    $region11: #{encoder_forward.1} parent=1 // pred_check_branch
      %30 = sbr.rel (0) target = $region13
    $region12: #{encoder_forward.1} parent=1 // pred_region
      _
    $region13: #{encoder_forward.1} parent=1 // pred_fallthru
      _
    // Predicated region
    $region14: #{encoder_forward.1} parent=1 // pred_check
      _
    $region15: #{encoder_forward.1} parent=1 // pred_check_branch
      %32 = sbr.rel (0) target = $region17
    $region16: #{encoder_forward.1} parent=1 // pred_region
      %34 = vsyncadd [#allocation5], 0
      %s35 = sshll.u32 %s3, 4
      %s36 = int_to_ptr.hbm [resolvable:$true] %s35
      %s37 = sshll.u32 [#allocation4], 4
      %s38 = int_to_ptr.vmem [resolvable:$true] %s37
      %43 = dma.hbm_to_vmem [thread:$0]  %s36, 8192, %s38, [#allocation5], 128, 128, 8
    $region17: #{encoder_forward.1} parent=1 // pred_fallthru
      _
    // Predicated region
    $region18: #{encoder_forward.1} parent=1 // pred_check
      _
    $region19: #{encoder_forward.1} parent=1 // pred_check_branch
      %45 = sbr.rel (0) target = $region21
    $region20: #{encoder_forward.1} parent=1 // pred_region
      _
    $region21: #{encoder_forward.1} parent=1 // pred_fallthru
      _
    // Predicated region
    $region22: #{encoder_forward.1} parent=1 // pred_check
      _
    $region23: #{encoder_forward.1} parent=1 // pred_check_branch
      %47 = sbr.rel (0) target = $region25
    $region24: #{encoder_forward.1} parent=1 // pred_region
      %49 = vsyncadd [#allocation5], 0
      %s50 = sshll.u32 %s5, 4
      %s51 = int_to_ptr.hbm [resolvable:$true] %s50
      %s52 = sshll.u32 [#allocation6], 4
      %s53 = int_to_ptr.vmem [resolvable:$true] %s52
      %58 = dma.hbm_to_vmem [thread:$0]  %s51, 2048, %s53, [#allocation5], 64, 64, 4
    $region25: #{encoder_forward.1} parent=1 // pred_fallthru
      _
    // Predicated region
    $region26: #{encoder_forward.1} parent=1 // pred_check
      _
    $region27: #{encoder_forward.1} parent=1 // pred_check_branch
      %60 = sbr.rel (0) target = $region29
    $region28: #{encoder_forward.1} parent=1 // pred_region
      _
    $region29: #{encoder_forward.1} parent=1 // pred_fallthru
      _
    // Predicated region
    $region30: #{encoder_forward.1} parent=1 // pred_check
      _
    $region31: #{encoder_forward.1} parent=1 // pred_check_branch
      %62 = sbr.rel (0) target = $region33
    $region32: #{encoder_forward.1} parent=1 // pred_region
      %64 = dma.done [#allocation3], 6400
    $region33: #{encoder_forward.1} parent=1 // pred_fallthru
      _
    // Predicated region
    $region34: #{encoder_forward.1} parent=1 // pred_check
      _
    $region35: #{encoder_forward.1} parent=1 // pred_check_branch
      %66 = sbr.rel (0) target = $region37
    $region36: #{encoder_forward.1} parent=1 // pred_region
      %68 = dma.done [#allocation5], 8192
    $region37: #{encoder_forward.1} parent=1 // pred_fallthru
      _
    // Predicated region
    $region38: #{encoder_forward.1} parent=1 // pred_check
      _
    $region39: #{encoder_forward.1} parent=1 // pred_check_branch
      %70 = sbr.rel (0) target = $region41
    $region40: #{encoder_forward.1} parent=1 // pred_region
      %72 = dma.done [#allocation5], 2048
    $region41: #{encoder_forward.1} parent=1 // pred_fallthru
      _
    %v74 = vld [vmem:[%s0] sm:$0xff]
    %v75 = vld [vmem:[%s0 + $0x8] sm:$0xff]
    %v76 = vld [vmem:[#allocation2] sm:$0xff]
    %v77 = vld [vmem:[#allocation2 + $0x8] sm:$0xff]
    %v78 = vld [vmem:[#allocation2 + $0x10] sm:$0xff]
    %v79 = vld [vmem:[#allocation2 + $0x18] sm:$0xff]
    %v80 = vld [vmem:[#allocation2 + $0x20] sm:$0xff]
    %v81 = vld [vmem:[#allocation2 + $0x28] sm:$0xff]
    %v82 = vld [vmem:[#allocation2 + $0x30] sm:$0xff]
    %v83 = vld [vmem:[#allocation2 + $0x38] sm:$0xff]
    %v84 = vld [vmem:[#allocation2 + $0x40] sm:$0xff]
    %v85 = vld [vmem:[#allocation2 + $0x48] sm:$0xff]
    %v86 = vld [vmem:[#allocation2 + $0x50] sm:$0xff]
    %v87 = vld [vmem:[#allocation2 + $0x58] sm:$0xff]
    %v88 = vld [vmem:[#allocation2 + $0x60] sm:$0xff]
    %v89 = vld [vmem:[#allocation2 + $0x68] sm:$0xff]
    %v90 = vld [vmem:[#allocation2 + $0x70] sm:$0xff]
    %v91 = vld [vmem:[#allocation2 + $0x78] sm:$0xff]
    %v92 = vld [vmem:[#allocation2 + $0x80] sm:$0xff]
    %v93 = vld [vmem:[#allocation2 + $0x88] sm:$0xff]
    %v94 = vld [vmem:[#allocation2 + $0x90] sm:$0xff]
    %v95 = vld [vmem:[#allocation2 + $0x98] sm:$0xff]
    %v96 = vld [vmem:[#allocation2 + $0xa0] sm:$0xff]
    %v97 = vld [vmem:[#allocation2 + $0xa8] sm:$0xff]
    %v98 = vld [vmem:[#allocation2 + $0xb0] sm:$0xff]
    %v99 = vld [vmem:[#allocation2 + $0xb8] sm:$0xff]
    %v100 = vld [vmem:[#allocation2 + $0xc0] sm:$0xff]
    %v101 = vld [vmem:[#allocation2 + $0xc8] sm:$0xff]
    %v102 = vld [vmem:[#allocation2 + $0xd0] sm:$0xff]
    %v103 = vld [vmem:[#allocation2 + $0xd8] sm:$0xff]
    %v104 = vld [vmem:[#allocation2 + $0xe0] sm:$0xff]
    %v105 = vld [vmem:[#allocation2 + $0xe8] sm:$0xff]
    %v106 = vld [vmem:[#allocation2 + $0xf0] sm:$0xff]
    %v107 = vld [vmem:[#allocation2 + $0xf8] sm:$0xff]
    %v108 = vld [vmem:[#allocation2 + $0x100] sm:$0xff]
    %v109 = vld [vmem:[#allocation2 + $0x108] sm:$0xff]
    %v110 = vld [vmem:[#allocation2 + $0x110] sm:$0xff]
    %v111 = vld [vmem:[#allocation2 + $0x118] sm:$0xff]
    %v112 = vld [vmem:[#allocation2 + $0x120] sm:$0xff]
    %v113 = vld [vmem:[#allocation2 + $0x128] sm:$0xff]
    %v114 = vld [vmem:[#allocation2 + $0x130] sm:$0xff]
    %v115 = vld [vmem:[#allocation2 + $0x138] sm:$0xff]
    %v116 = vld [vmem:[#allocation2 + $0x140] sm:$0xff]
    %v117 = vld [vmem:[#allocation2 + $0x148] sm:$0xff]
    %v118 = vld [vmem:[#allocation2 + $0x150] sm:$0xff]
    %v119 = vld [vmem:[#allocation2 + $0x158] sm:$0xff]
    %v120 = vld [vmem:[#allocation2 + $0x160] sm:$0xff]
    %v121 = vld [vmem:[#allocation2 + $0x168] sm:$0xff]
    %v122 = vld [vmem:[#allocation2 + $0x170] sm:$0xff]
    %v123 = vld [vmem:[#allocation2 + $0x178] sm:$0xff]
    %v124 = vld [vmem:[#allocation2 + $0x180] sm:$0x33]
    %v125 = vld [vmem:[#allocation2 + $0x188] sm:$0x33]
    %v126 = vld [vmem:[%s2] sm:$0xf]
    %v128 = vperm.slane %v126, 0
    %v129 = vperm.slane %v126, 1
    %v130 = vperm.slane %v126, 2
    %v131 = vperm.slane %v126, 3
    %v138 = vunpack.c.l.b16 %v74
    %v139 = vunpack.c.h.b16 %v74
    %v140 = vunpack.c.l.b16 %v75
    %v141 = vunpack.c.h.b16 %v75
    %v142 = vpack.c.b16 %v140, %v138
    %v143 = vpack.c.b16 %v141, %v139
    %v195 = vunpack.c.l.b16 %v76
    %v196 = vunpack.c.h.b16 %v76
    %v197 = vunpack.c.l.b16 %v77
    %v198 = vunpack.c.h.b16 %v77
    %v199 = vunpack.c.l.b16 %v78
    %v200 = vunpack.c.h.b16 %v78
    %v201 = vunpack.c.l.b16 %v79
    %v202 = vunpack.c.h.b16 %v79
    %v203 = vunpack.c.l.b16 %v80
    %v204 = vunpack.c.h.b16 %v80
    %v205 = vunpack.c.l.b16 %v81
    %v206 = vunpack.c.h.b16 %v81
    %v207 = vunpack.c.l.b16 %v82
    %v208 = vunpack.c.h.b16 %v82
    %v209 = vunpack.c.l.b16 %v83
    %v210 = vunpack.c.h.b16 %v83
    %v211 = vunpack.c.l.b16 %v84
    %v212 = vunpack.c.h.b16 %v84
    %v213 = vunpack.c.l.b16 %v85
    %v214 = vunpack.c.h.b16 %v85
    %v215 = vunpack.c.l.b16 %v86
    %v216 = vunpack.c.h.b16 %v86
    %v217 = vunpack.c.l.b16 %v87
    %v218 = vunpack.c.h.b16 %v87
    %v219 = vunpack.c.l.b16 %v88
    %v220 = vunpack.c.h.b16 %v88
    %v221 = vunpack.c.l.b16 %v89
    %v222 = vunpack.c.h.b16 %v89
    %v223 = vunpack.c.l.b16 %v90
    %v224 = vunpack.c.h.b16 %v90
    %v225 = vunpack.c.l.b16 %v91
    %v226 = vunpack.c.h.b16 %v91
    %v227 = vunpack.c.l.b16 %v92
    %v228 = vunpack.c.h.b16 %v92
    %v229 = vunpack.c.l.b16 %v93
    %v230 = vunpack.c.h.b16 %v93
    %v231 = vunpack.c.l.b16 %v94
    %v232 = vunpack.c.h.b16 %v94
    %v233 = vunpack.c.l.b16 %v95
    %v234 = vunpack.c.h.b16 %v95
    %v235 = vunpack.c.l.b16 %v96
    %v236 = vunpack.c.h.b16 %v96
    %v237 = vunpack.c.l.b16 %v97
    %v238 = vunpack.c.h.b16 %v97
    %v239 = vunpack.c.l.b16 %v98
    %v240 = vunpack.c.h.b16 %v98
    %v241 = vunpack.c.l.b16 %v99
    %v242 = vunpack.c.h.b16 %v99
    %v243 = vunpack.c.l.b16 %v100
    %v244 = vunpack.c.h.b16 %v100
    %v245 = vunpack.c.l.b16 %v101
    %v246 = vunpack.c.h.b16 %v101
    %v247 = vunpack.c.l.b16 %v102
    %v248 = vunpack.c.h.b16 %v102
    %v249 = vunpack.c.l.b16 %v103
    %v250 = vunpack.c.h.b16 %v103
    %v251 = vunpack.c.l.b16 %v104
    %v252 = vunpack.c.h.b16 %v104
    %v253 = vunpack.c.l.b16 %v105
    %v254 = vunpack.c.h.b16 %v105
    %v255 = vunpack.c.l.b16 %v106
    %v256 = vunpack.c.h.b16 %v106
    %v257 = vunpack.c.l.b16 %v107
    %v258 = vunpack.c.h.b16 %v107
    %v259 = vunpack.c.l.b16 %v108
    %v260 = vunpack.c.h.b16 %v108
    %v261 = vunpack.c.l.b16 %v109
    %v262 = vunpack.c.h.b16 %v109
    %v263 = vunpack.c.l.b16 %v110
    %v264 = vunpack.c.h.b16 %v110
    %v265 = vunpack.c.l.b16 %v111
    %v266 = vunpack.c.h.b16 %v111
    %v267 = vunpack.c.l.b16 %v112
    %v268 = vunpack.c.h.b16 %v112
    %v269 = vunpack.c.l.b16 %v113
    %v270 = vunpack.c.h.b16 %v113
    %v271 = vunpack.c.l.b16 %v114
    %v272 = vunpack.c.h.b16 %v114
    %v273 = vunpack.c.l.b16 %v115
    %v274 = vunpack.c.h.b16 %v115
    %v275 = vunpack.c.l.b16 %v116
    %v276 = vunpack.c.h.b16 %v116
    %v277 = vunpack.c.l.b16 %v117
    %v278 = vunpack.c.h.b16 %v117
    %v279 = vunpack.c.l.b16 %v118
    %v280 = vunpack.c.h.b16 %v118
    %v281 = vunpack.c.l.b16 %v119
    %v282 = vunpack.c.h.b16 %v119
    %v283 = vunpack.c.l.b16 %v120
    %v284 = vunpack.c.h.b16 %v120
    %v285 = vunpack.c.l.b16 %v121
    %v286 = vunpack.c.h.b16 %v121
    %v287 = vunpack.c.l.b16 %v122
    %v288 = vunpack.c.h.b16 %v122
    %v289 = vunpack.c.l.b16 %v123
    %v290 = vunpack.c.h.b16 %v123
    %v291 = vunpack.c.l.b16 %v124
    %v292 = vunpack.c.h.b16 %v124
    %v293 = vunpack.c.l.b16 %v125
    %v294 = vunpack.c.h.b16 %v125
    %v295 = vpack.c.b16 %v199, %v195
    %v296 = vpack.c.b16 %v200, %v196
    %v297 = vpack.c.b16 %v201, %v197
    %v298 = vpack.c.b16 %v202, %v198
    %v299 = vpack.c.b16 %v207, %v203
    %v300 = vpack.c.b16 %v208, %v204
    %v301 = vpack.c.b16 %v209, %v205
    %v302 = vpack.c.b16 %v210, %v206
    %v303 = vpack.c.b16 %v215, %v211
    %v304 = vpack.c.b16 %v216, %v212
    %v305 = vpack.c.b16 %v217, %v213
    %v306 = vpack.c.b16 %v218, %v214
    %v307 = vpack.c.b16 %v223, %v219
    %v308 = vpack.c.b16 %v224, %v220
    %v309 = vpack.c.b16 %v225, %v221
    %v310 = vpack.c.b16 %v226, %v222
    %v311 = vpack.c.b16 %v231, %v227
    %v312 = vpack.c.b16 %v232, %v228
    %v313 = vpack.c.b16 %v233, %v229
    %v314 = vpack.c.b16 %v234, %v230
    %v315 = vpack.c.b16 %v239, %v235
    %v316 = vpack.c.b16 %v240, %v236
    %v317 = vpack.c.b16 %v241, %v237
    %v318 = vpack.c.b16 %v242, %v238
    %v319 = vpack.c.b16 %v247, %v243
    %v320 = vpack.c.b16 %v248, %v244
    %v321 = vpack.c.b16 %v249, %v245
    %v322 = vpack.c.b16 %v250, %v246
    %v323 = vpack.c.b16 %v255, %v251
    %v324 = vpack.c.b16 %v256, %v252
    %v325 = vpack.c.b16 %v257, %v253
    %v326 = vpack.c.b16 %v258, %v254
    %v327 = vpack.c.b16 %v263, %v259
    %v328 = vpack.c.b16 %v264, %v260
    %v329 = vpack.c.b16 %v265, %v261
    %v330 = vpack.c.b16 %v266, %v262
    %v331 = vpack.c.b16 %v271, %v267
    %v332 = vpack.c.b16 %v272, %v268
    %v333 = vpack.c.b16 %v273, %v269
    %v334 = vpack.c.b16 %v274, %v270
    %v335 = vpack.c.b16 %v279, %v275
    %v336 = vpack.c.b16 %v280, %v276
    %v337 = vpack.c.b16 %v281, %v277
    %v338 = vpack.c.b16 %v282, %v278
    %v339 = vpack.c.b16 %v287, %v283
    %v340 = vpack.c.b16 %v288, %v284
    %v341 = vpack.c.b16 %v289, %v285
    %v342 = vpack.c.b16 %v290, %v286
    %v343 = vpack.c.b16 %v291, %v291
    %v344 = vpack.c.b16 %v292, %v292
    %v345 = vpack.c.b16 %v293, %v293
    %v346 = vpack.c.b16 %v294, %v294
    %vm395 = vcmask 556032
    %v397 = vsel %vm395, %v143, 0
    %vm399 = vcmask 1041408
    %v401 = vsel %vm399, %v343, 0
    %v404 = vsel %vm399, %v344, 0
    %v407 = vsel %vm399, %v345, 0
    %v410 = vsel %vm399, %v346, 0
    %412 = vmatpush.bf16.msra.mxu0 %v323
    %413 = vmatpush.bf16.msra.mxu0 %v319
    %414 = vmatpush.bf16.msra.mxu0 %v315
    %415 = vmatpush.bf16.msra.mxu0 %v311
    %416 = vmatpush.bf16.msra.mxu0 %v307
    %417 = vmatpush.bf16.msra.mxu0 %v303
    %418 = vmatpush.bf16.msra.mxu0 %v299
    %419 = vmatpush.bf16.msra.mxu0 %v295
    %420 = vmatmul.bf16.gmra.mxu0 %v142
    %v421 = vpop.f32.mrf.mxu0
    %v422 = vadd.f32 %v128, %v421
    %v423 = vpop.f32.mrf.mxu0
    %v424 = vadd.f32 %v128, %v423
    %425 = vdwg.mxu0
    %426 = vmatpush.bf16.msra.mxu0 0
    %427 = vmatpush.bf16.msra.mxu0 0
    %428 = vmatpush.bf16.msra.mxu0 0
    %429 = vmatpush.bf16.msra.mxu0 %v401
    %430 = vmatpush.bf16.msra.mxu0 %v339
    %431 = vmatpush.bf16.msra.mxu0 %v335
    %432 = vmatpush.bf16.msra.mxu0 %v331
    %433 = vmatpush.bf16.msra.mxu0 %v327
    %434 = vmatmul.bf16.gmra.mxu0 %v397
    %v435 = vpop.f32.mrf.mxu0
    %v436 = vadd.f32 %v422, %v435
    %v437 = vpop.f32.mrf.mxu0
    %v438 = vadd.f32 %v424, %v437
    %439 = vdwg.mxu0
    %440 = vmatpush.bf16.msra.mxu0 %v324
    %441 = vmatpush.bf16.msra.mxu0 %v320
    %442 = vmatpush.bf16.msra.mxu0 %v316
    %443 = vmatpush.bf16.msra.mxu0 %v312
    %444 = vmatpush.bf16.msra.mxu0 %v308
    %445 = vmatpush.bf16.msra.mxu0 %v304
    %446 = vmatpush.bf16.msra.mxu0 %v300
    %447 = vmatpush.bf16.msra.mxu0 %v296
    %448 = vmatmul.bf16.gmra.mxu0 %v142
    %v449 = vpop.f32.mrf.mxu0
    %v450 = vadd.f32 %v129, %v449
    %v451 = vpop.f32.mrf.mxu0
    %v452 = vadd.f32 %v129, %v451
    %453 = vdwg.mxu0
    %454 = vmatpush.bf16.msra.mxu0 0
    %455 = vmatpush.bf16.msra.mxu0 0
    %456 = vmatpush.bf16.msra.mxu0 0
    %457 = vmatpush.bf16.msra.mxu0 %v404
    %458 = vmatpush.bf16.msra.mxu0 %v340
    %459 = vmatpush.bf16.msra.mxu0 %v336
    %460 = vmatpush.bf16.msra.mxu0 %v332
    %461 = vmatpush.bf16.msra.mxu0 %v328
    %462 = vmatmul.bf16.gmra.mxu0 %v397
    %v463 = vpop.f32.mrf.mxu0
    %v464 = vadd.f32 %v450, %v463
    %v465 = vpop.f32.mrf.mxu0
    %v466 = vadd.f32 %v452, %v465
    %467 = vdwg.mxu0
    %468 = vmatpush.bf16.msra.mxu0 %v325
    %469 = vmatpush.bf16.msra.mxu0 %v321
    %470 = vmatpush.bf16.msra.mxu0 %v317
    %471 = vmatpush.bf16.msra.mxu0 %v313
    %472 = vmatpush.bf16.msra.mxu0 %v309
    %473 = vmatpush.bf16.msra.mxu0 %v305
    %474 = vmatpush.bf16.msra.mxu0 %v301
    %475 = vmatpush.bf16.msra.mxu0 %v297
    %476 = vmatmul.bf16.gmra.mxu0 %v142
    %v477 = vpop.f32.mrf.mxu0
    %v478 = vadd.f32 %v130, %v477
    %v479 = vpop.f32.mrf.mxu0
    %v480 = vadd.f32 %v130, %v479
    %481 = vdwg.mxu0
    %482 = vmatpush.bf16.msra.mxu0 0
    %483 = vmatpush.bf16.msra.mxu0 0
    %484 = vmatpush.bf16.msra.mxu0 0
    %485 = vmatpush.bf16.msra.mxu0 %v407
    %486 = vmatpush.bf16.msra.mxu0 %v341
    %487 = vmatpush.bf16.msra.mxu0 %v337
    %488 = vmatpush.bf16.msra.mxu0 %v333
    %489 = vmatpush.bf16.msra.mxu0 %v329
    %490 = vmatmul.bf16.gmra.mxu0 %v397
    %v491 = vpop.f32.mrf.mxu0
    %v492 = vadd.f32 %v478, %v491
    %v493 = vpop.f32.mrf.mxu0
    %v494 = vadd.f32 %v480, %v493
    %495 = vdwg.mxu0
    %496 = vmatpush.bf16.msra.mxu0 %v326
    %497 = vmatpush.bf16.msra.mxu0 %v322
    %498 = vmatpush.bf16.msra.mxu0 %v318
    %499 = vmatpush.bf16.msra.mxu0 %v314
    %500 = vmatpush.bf16.msra.mxu0 %v310
    %501 = vmatpush.bf16.msra.mxu0 %v306
    %502 = vmatpush.bf16.msra.mxu0 %v302
    %503 = vmatpush.bf16.msra.mxu0 %v298
    %504 = vmatmul.bf16.gmra.mxu0 %v142
    %v505 = vpop.f32.mrf.mxu0
    %v506 = vadd.f32 %v131, %v505
    %v507 = vpop.f32.mrf.mxu0
    %v508 = vadd.f32 %v131, %v507
    %509 = vdwg.mxu0
    %510 = vmatpush.bf16.msra.mxu0 0
    %511 = vmatpush.bf16.msra.mxu0 0
    %512 = vmatpush.bf16.msra.mxu0 0
    %513 = vmatpush.bf16.msra.mxu0 %v410
    %514 = vmatpush.bf16.msra.mxu0 %v342
    %515 = vmatpush.bf16.msra.mxu0 %v338
    %516 = vmatpush.bf16.msra.mxu0 %v334
    %517 = vmatpush.bf16.msra.mxu0 %v330
    %518 = vmatmul.bf16.gmra.mxu0 %v397
    %v519 = vpop.f32.mrf.mxu0
    %v520 = vadd.f32 %v506, %v519
    %v521 = vpop.f32.mrf.mxu0
    %v522 = vadd.f32 %v508, %v521
    %523 = vdwg.mxu0
    %v524 = vmax.f32 %v436, 0.0
    %v525 = vmax.f32 %v464, 0.0
    %v526 = vmax.f32 %v492, 0.0
    %v527 = vmax.f32 %v520, 0.0
    %v528 = vmax.f32 %v438, 0.0
    %v529 = vmax.f32 %v466, 0.0
    %v530 = vmax.f32 %v494, 0.0
    %v531 = vmax.f32 %v522, 0.0
    %v532 = vpack.c.bf16 %v528, %v524
    %v533 = vpack.c.bf16 %v529, %v525
    %v534 = vpack.c.bf16 %v530, %v526
    %v535 = vpack.c.bf16 %v531, %v527
    %v536 = vld [vmem:[#allocation4] sm:$0xff]
    %v537 = vld [vmem:[#allocation4 + $0x8] sm:$0xff]
    %v538 = vld [vmem:[#allocation4 + $0x10] sm:$0xff]
    %v539 = vld [vmem:[#allocation4 + $0x18] sm:$0xff]
    %v540 = vld [vmem:[#allocation4 + $0x20] sm:$0xff]
    %v541 = vld [vmem:[#allocation4 + $0x28] sm:$0xff]
    %v542 = vld [vmem:[#allocation4 + $0x30] sm:$0xff]
    %v543 = vld [vmem:[#allocation4 + $0x38] sm:$0xff]
    %v544 = vld [vmem:[#allocation4 + $0x40] sm:$0xff]
    %v545 = vld [vmem:[#allocation4 + $0x48] sm:$0xff]
    %v546 = vld [vmem:[#allocation4 + $0x50] sm:$0xff]
    %v547 = vld [vmem:[#allocation4 + $0x58] sm:$0xff]
    %v548 = vld [vmem:[#allocation4 + $0x60] sm:$0xff]
    %v549 = vld [vmem:[#allocation4 + $0x68] sm:$0xff]
    %v550 = vld [vmem:[#allocation4 + $0x70] sm:$0xff]
    %v551 = vld [vmem:[#allocation4 + $0x78] sm:$0xff]
    %v552 = vld [vmem:[#allocation4 + $0x80] sm:$0xff]
    %v553 = vld [vmem:[#allocation4 + $0x88] sm:$0xff]
    %v554 = vld [vmem:[#allocation4 + $0x90] sm:$0xff]
    %v555 = vld [vmem:[#allocation4 + $0x98] sm:$0xff]
    %v556 = vld [vmem:[#allocation4 + $0xa0] sm:$0xff]
    %v557 = vld [vmem:[#allocation4 + $0xa8] sm:$0xff]
    %v558 = vld [vmem:[#allocation4 + $0xb0] sm:$0xff]
    %v559 = vld [vmem:[#allocation4 + $0xb8] sm:$0xff]
    %v560 = vld [vmem:[#allocation4 + $0xc0] sm:$0xff]
    %v561 = vld [vmem:[#allocation4 + $0xc8] sm:$0xff]
    %v562 = vld [vmem:[#allocation4 + $0xd0] sm:$0xff]
    %v563 = vld [vmem:[#allocation4 + $0xd8] sm:$0xff]
    %v564 = vld [vmem:[#allocation4 + $0xe0] sm:$0xff]
    %v565 = vld [vmem:[#allocation4 + $0xe8] sm:$0xff]
    %v566 = vld [vmem:[#allocation4 + $0xf0] sm:$0xff]
    %v567 = vld [vmem:[#allocation4 + $0xf8] sm:$0xff]
    %v568 = vld [vmem:[#allocation4 + $0x100] sm:$0xff]
    %v569 = vld [vmem:[#allocation4 + $0x108] sm:$0xff]
    %v570 = vld [vmem:[#allocation4 + $0x110] sm:$0xff]
    %v571 = vld [vmem:[#allocation4 + $0x118] sm:$0xff]
    %v572 = vld [vmem:[#allocation4 + $0x120] sm:$0xff]
    %v573 = vld [vmem:[#allocation4 + $0x128] sm:$0xff]
    %v574 = vld [vmem:[#allocation4 + $0x130] sm:$0xff]
    %v575 = vld [vmem:[#allocation4 + $0x138] sm:$0xff]
    %v576 = vld [vmem:[#allocation4 + $0x140] sm:$0xff]
    %v577 = vld [vmem:[#allocation4 + $0x148] sm:$0xff]
    %v578 = vld [vmem:[#allocation4 + $0x150] sm:$0xff]
    %v579 = vld [vmem:[#allocation4 + $0x158] sm:$0xff]
    %v580 = vld [vmem:[#allocation4 + $0x160] sm:$0xff]
    %v581 = vld [vmem:[#allocation4 + $0x168] sm:$0xff]
    %v582 = vld [vmem:[#allocation4 + $0x170] sm:$0xff]
    %v583 = vld [vmem:[#allocation4 + $0x178] sm:$0xff]
    %v584 = vld [vmem:[#allocation4 + $0x180] sm:$0xff]
    %v585 = vld [vmem:[#allocation4 + $0x188] sm:$0xff]
    %v586 = vld [vmem:[#allocation4 + $0x190] sm:$0xff]
    %v587 = vld [vmem:[#allocation4 + $0x198] sm:$0xff]
    %v588 = vld [vmem:[#allocation4 + $0x1a0] sm:$0xff]
    %v589 = vld [vmem:[#allocation4 + $0x1a8] sm:$0xff]
    %v590 = vld [vmem:[#allocation4 + $0x1b0] sm:$0xff]
    %v591 = vld [vmem:[#allocation4 + $0x1b8] sm:$0xff]
    %v592 = vld [vmem:[#allocation4 + $0x1c0] sm:$0xff]
    %v593 = vld [vmem:[#allocation4 + $0x1c8] sm:$0xff]
    %v594 = vld [vmem:[#allocation4 + $0x1d0] sm:$0xff]
    %v595 = vld [vmem:[#allocation4 + $0x1d8] sm:$0xff]
    %v596 = vld [vmem:[#allocation4 + $0x1e0] sm:$0xff]
    %v597 = vld [vmem:[#allocation4 + $0x1e8] sm:$0xff]
    %v598 = vld [vmem:[#allocation4 + $0x1f0] sm:$0xff]
    %v599 = vld [vmem:[#allocation4 + $0x1f8] sm:$0xff]
    %v600 = vld [vmem:[%s4] sm:$0x3]
    %v602 = vperm.slane %v600, 0
    %v603 = vperm.slane %v600, 1
    %v670 = vunpack.c.l.b16 %v536
    %v671 = vunpack.c.h.b16 %v536
    %v672 = vunpack.c.l.b16 %v537
    %v673 = vunpack.c.h.b16 %v537
    %v674 = vunpack.c.l.b16 %v538
    %v675 = vunpack.c.h.b16 %v538
    %v676 = vunpack.c.l.b16 %v539
    %v677 = vunpack.c.h.b16 %v539
    %v678 = vunpack.c.l.b16 %v540
    %v679 = vunpack.c.h.b16 %v540
    %v680 = vunpack.c.l.b16 %v541
    %v681 = vunpack.c.h.b16 %v541
    %v682 = vunpack.c.l.b16 %v542
    %v683 = vunpack.c.h.b16 %v542
    %v684 = vunpack.c.l.b16 %v543
    %v685 = vunpack.c.h.b16 %v543
    %v686 = vunpack.c.l.b16 %v544
    %v687 = vunpack.c.h.b16 %v544
    %v688 = vunpack.c.l.b16 %v545
    %v689 = vunpack.c.h.b16 %v545
    %v690 = vunpack.c.l.b16 %v546
    %v691 = vunpack.c.h.b16 %v546
    %v692 = vunpack.c.l.b16 %v547
    %v693 = vunpack.c.h.b16 %v547
    %v694 = vunpack.c.l.b16 %v548
    %v695 = vunpack.c.h.b16 %v548
    %v696 = vunpack.c.l.b16 %v549
    %v697 = vunpack.c.h.b16 %v549
    %v698 = vunpack.c.l.b16 %v550
    %v699 = vunpack.c.h.b16 %v550
    %v700 = vunpack.c.l.b16 %v551
    %v701 = vunpack.c.h.b16 %v551
    %v702 = vunpack.c.l.b16 %v552
    %v703 = vunpack.c.h.b16 %v552
    %v704 = vunpack.c.l.b16 %v553
    %v705 = vunpack.c.h.b16 %v553
    %v706 = vunpack.c.l.b16 %v554
    %v707 = vunpack.c.h.b16 %v554
    %v708 = vunpack.c.l.b16 %v555
    %v709 = vunpack.c.h.b16 %v555
    %v710 = vunpack.c.l.b16 %v556
    %v711 = vunpack.c.h.b16 %v556
    %v712 = vunpack.c.l.b16 %v557
    %v713 = vunpack.c.h.b16 %v557
    %v714 = vunpack.c.l.b16 %v558
    %v715 = vunpack.c.h.b16 %v558
    %v716 = vunpack.c.l.b16 %v559
    %v717 = vunpack.c.h.b16 %v559
    %v718 = vunpack.c.l.b16 %v560
    %v719 = vunpack.c.h.b16 %v560
    %v720 = vunpack.c.l.b16 %v561
    %v721 = vunpack.c.h.b16 %v561
    %v722 = vunpack.c.l.b16 %v562
    %v723 = vunpack.c.h.b16 %v562
    %v724 = vunpack.c.l.b16 %v563
    %v725 = vunpack.c.h.b16 %v563
    %v726 = vunpack.c.l.b16 %v564
    %v727 = vunpack.c.h.b16 %v564
    %v728 = vunpack.c.l.b16 %v565
    %v729 = vunpack.c.h.b16 %v565
    %v730 = vunpack.c.l.b16 %v566
    %v731 = vunpack.c.h.b16 %v566
    %v732 = vunpack.c.l.b16 %v567
    %v733 = vunpack.c.h.b16 %v567
    %v734 = vunpack.c.l.b16 %v568
    %v735 = vunpack.c.h.b16 %v568
    %v736 = vunpack.c.l.b16 %v569
    %v737 = vunpack.c.h.b16 %v569
    %v738 = vunpack.c.l.b16 %v570
    %v739 = vunpack.c.h.b16 %v570
    %v740 = vunpack.c.l.b16 %v571
    %v741 = vunpack.c.h.b16 %v571
    %v742 = vunpack.c.l.b16 %v572
    %v743 = vunpack.c.h.b16 %v572
    %v744 = vunpack.c.l.b16 %v573
    %v745 = vunpack.c.h.b16 %v573
    %v746 = vunpack.c.l.b16 %v574
    %v747 = vunpack.c.h.b16 %v574
    %v748 = vunpack.c.l.b16 %v575
    %v749 = vunpack.c.h.b16 %v575
    %v750 = vunpack.c.l.b16 %v576
    %v751 = vunpack.c.h.b16 %v576
    %v752 = vunpack.c.l.b16 %v577
    %v753 = vunpack.c.h.b16 %v577
    %v754 = vunpack.c.l.b16 %v578
    %v755 = vunpack.c.h.b16 %v578
    %v756 = vunpack.c.l.b16 %v579
    %v757 = vunpack.c.h.b16 %v579
    %v758 = vunpack.c.l.b16 %v580
    %v759 = vunpack.c.h.b16 %v580
    %v760 = vunpack.c.l.b16 %v581
    %v761 = vunpack.c.h.b16 %v581
    %v762 = vunpack.c.l.b16 %v582
    %v763 = vunpack.c.h.b16 %v582
    %v764 = vunpack.c.l.b16 %v583
    %v765 = vunpack.c.h.b16 %v583
    %v766 = vunpack.c.l.b16 %v584
    %v767 = vunpack.c.h.b16 %v584
    %v768 = vunpack.c.l.b16 %v585
    %v769 = vunpack.c.h.b16 %v585
    %v770 = vunpack.c.l.b16 %v586
    %v771 = vunpack.c.h.b16 %v586
    %v772 = vunpack.c.l.b16 %v587
    %v773 = vunpack.c.h.b16 %v587
    %v774 = vunpack.c.l.b16 %v588
    %v775 = vunpack.c.h.b16 %v588
    %v776 = vunpack.c.l.b16 %v589
    %v777 = vunpack.c.h.b16 %v589
    %v778 = vunpack.c.l.b16 %v590
    %v779 = vunpack.c.h.b16 %v590
    %v780 = vunpack.c.l.b16 %v591
    %v781 = vunpack.c.h.b16 %v591
    %v782 = vunpack.c.l.b16 %v592
    %v783 = vunpack.c.h.b16 %v592
    %v784 = vunpack.c.l.b16 %v593
    %v785 = vunpack.c.h.b16 %v593
    %v786 = vunpack.c.l.b16 %v594
    %v787 = vunpack.c.h.b16 %v594
    %v788 = vunpack.c.l.b16 %v595
    %v789 = vunpack.c.h.b16 %v595
    %v790 = vunpack.c.l.b16 %v596
    %v791 = vunpack.c.h.b16 %v596
    %v792 = vunpack.c.l.b16 %v597
    %v793 = vunpack.c.h.b16 %v597
    %v794 = vunpack.c.l.b16 %v598
    %v795 = vunpack.c.h.b16 %v598
    %v796 = vunpack.c.l.b16 %v599
    %v797 = vunpack.c.h.b16 %v599
    %v798 = vpack.c.b16 %v672, %v670
    %v799 = vpack.c.b16 %v673, %v671
    %v800 = vpack.c.b16 %v676, %v674
    %v801 = vpack.c.b16 %v677, %v675
    %v802 = vpack.c.b16 %v680, %v678
    %v803 = vpack.c.b16 %v681, %v679
    %v804 = vpack.c.b16 %v684, %v682
    %v805 = vpack.c.b16 %v685, %v683
    %v806 = vpack.c.b16 %v688, %v686
    %v807 = vpack.c.b16 %v689, %v687
    %v808 = vpack.c.b16 %v692, %v690
    %v809 = vpack.c.b16 %v693, %v691
    %v810 = vpack.c.b16 %v696, %v694
    %v811 = vpack.c.b16 %v697, %v695
    %v812 = vpack.c.b16 %v700, %v698
    %v813 = vpack.c.b16 %v701, %v699
    %v814 = vpack.c.b16 %v704, %v702
    %v815 = vpack.c.b16 %v705, %v703
    %v816 = vpack.c.b16 %v708, %v706
    %v817 = vpack.c.b16 %v709, %v707
    %v818 = vpack.c.b16 %v712, %v710
    %v819 = vpack.c.b16 %v713, %v711
    %v820 = vpack.c.b16 %v716, %v714
    %v821 = vpack.c.b16 %v717, %v715
    %v822 = vpack.c.b16 %v720, %v718
    %v823 = vpack.c.b16 %v721, %v719
    %v824 = vpack.c.b16 %v724, %v722
    %v825 = vpack.c.b16 %v725, %v723
    %v826 = vpack.c.b16 %v728, %v726
    %v827 = vpack.c.b16 %v729, %v727
    %v828 = vpack.c.b16 %v732, %v730
    %v829 = vpack.c.b16 %v733, %v731
    %v830 = vpack.c.b16 %v736, %v734
    %v831 = vpack.c.b16 %v737, %v735
    %v832 = vpack.c.b16 %v740, %v738
    %v833 = vpack.c.b16 %v741, %v739
    %v834 = vpack.c.b16 %v744, %v742
    %v835 = vpack.c.b16 %v745, %v743
    %v836 = vpack.c.b16 %v748, %v746
    %v837 = vpack.c.b16 %v749, %v747
    %v838 = vpack.c.b16 %v752, %v750
    %v839 = vpack.c.b16 %v753, %v751
    %v840 = vpack.c.b16 %v756, %v754
    %v841 = vpack.c.b16 %v757, %v755
    %v842 = vpack.c.b16 %v760, %v758
    %v843 = vpack.c.b16 %v761, %v759
    %v844 = vpack.c.b16 %v764, %v762
    %v845 = vpack.c.b16 %v765, %v763
    %v846 = vpack.c.b16 %v768, %v766
    %v847 = vpack.c.b16 %v769, %v767
    %v848 = vpack.c.b16 %v772, %v770
    %v849 = vpack.c.b16 %v773, %v771
    %v850 = vpack.c.b16 %v776, %v774
    %v851 = vpack.c.b16 %v777, %v775
    %v852 = vpack.c.b16 %v780, %v778
    %v853 = vpack.c.b16 %v781, %v779
    %v854 = vpack.c.b16 %v784, %v782
    %v855 = vpack.c.b16 %v785, %v783
    %v856 = vpack.c.b16 %v788, %v786
    %v857 = vpack.c.b16 %v789, %v787
    %v858 = vpack.c.b16 %v792, %v790
    %v859 = vpack.c.b16 %v793, %v791
    %v860 = vpack.c.b16 %v796, %v794
    %v861 = vpack.c.b16 %v797, %v795
    %926 = vmatpush.bf16.msra.mxu0 %v812
    %927 = vmatpush.bf16.msra.mxu0 %v810
    %928 = vmatpush.bf16.msra.mxu0 %v808
    %929 = vmatpush.bf16.msra.mxu0 %v806
    %930 = vmatpush.bf16.msra.mxu0 %v804
    %931 = vmatpush.bf16.msra.mxu0 %v802
    %932 = vmatpush.bf16.msra.mxu0 %v800
    %933 = vmatpush.bf16.msra.mxu0 %v798
    %934 = vmatmul.bf16.gmra.mxu0 %v532
    %v935 = vpop.f32.mrf.mxu0
    %v936 = vadd.f32 %v602, %v935
    %v937 = vpop.f32.mrf.mxu0
    %v938 = vadd.f32 %v602, %v937
    %939 = vdwg.mxu0
    %940 = vmatpush.bf16.msra.mxu0 %v828
    %941 = vmatpush.bf16.msra.mxu0 %v826
    %942 = vmatpush.bf16.msra.mxu0 %v824
    %943 = vmatpush.bf16.msra.mxu0 %v822
    %944 = vmatpush.bf16.msra.mxu0 %v820
    %945 = vmatpush.bf16.msra.mxu0 %v818
    %946 = vmatpush.bf16.msra.mxu0 %v816
    %947 = vmatpush.bf16.msra.mxu0 %v814
    %948 = vmatmul.bf16.gmra.mxu0 %v533
    %v949 = vpop.f32.mrf.mxu0
    %v950 = vadd.f32 %v936, %v949
    %v951 = vpop.f32.mrf.mxu0
    %v952 = vadd.f32 %v938, %v951
    %953 = vdwg.mxu0
    %954 = vmatpush.bf16.msra.mxu0 %v844
    %955 = vmatpush.bf16.msra.mxu0 %v842
    %956 = vmatpush.bf16.msra.mxu0 %v840
    %957 = vmatpush.bf16.msra.mxu0 %v838
    %958 = vmatpush.bf16.msra.mxu0 %v836
    %959 = vmatpush.bf16.msra.mxu0 %v834
    %960 = vmatpush.bf16.msra.mxu0 %v832
    %961 = vmatpush.bf16.msra.mxu0 %v830
    %962 = vmatmul.bf16.gmra.mxu0 %v534
    %v963 = vpop.f32.mrf.mxu0
    %v964 = vadd.f32 %v950, %v963
    %v965 = vpop.f32.mrf.mxu0
    %v966 = vadd.f32 %v952, %v965
    %967 = vdwg.mxu0
    %968 = vmatpush.bf16.msra.mxu0 %v860
    %969 = vmatpush.bf16.msra.mxu0 %v858
    %970 = vmatpush.bf16.msra.mxu0 %v856
    %971 = vmatpush.bf16.msra.mxu0 %v854
    %972 = vmatpush.bf16.msra.mxu0 %v852
    %973 = vmatpush.bf16.msra.mxu0 %v850
    %974 = vmatpush.bf16.msra.mxu0 %v848
    %975 = vmatpush.bf16.msra.mxu0 %v846
    %976 = vmatmul.bf16.gmra.mxu0 %v535
    %v977 = vpop.f32.mrf.mxu0
    %v978 = vadd.f32 %v964, %v977
    %v979 = vpop.f32.mrf.mxu0
    %v980 = vadd.f32 %v966, %v979
    %981 = vdwg.mxu0
    %982 = vmatpush.bf16.msra.mxu0 %v813
    %983 = vmatpush.bf16.msra.mxu0 %v811
    %984 = vmatpush.bf16.msra.mxu0 %v809
    %985 = vmatpush.bf16.msra.mxu0 %v807
    %986 = vmatpush.bf16.msra.mxu0 %v805
    %987 = vmatpush.bf16.msra.mxu0 %v803
    %988 = vmatpush.bf16.msra.mxu0 %v801
    %989 = vmatpush.bf16.msra.mxu0 %v799
    %990 = vmatmul.bf16.gmra.mxu0 %v532
    %v991 = vpop.f32.mrf.mxu0
    %v992 = vadd.f32 %v603, %v991
    %v993 = vpop.f32.mrf.mxu0
    %v994 = vadd.f32 %v603, %v993
    %995 = vdwg.mxu0
    %996 = vmatpush.bf16.msra.mxu0 %v829
    %997 = vmatpush.bf16.msra.mxu0 %v827
    %998 = vmatpush.bf16.msra.mxu0 %v825
    %999 = vmatpush.bf16.msra.mxu0 %v823
    %1000 = vmatpush.bf16.msra.mxu0 %v821
    %1001 = vmatpush.bf16.msra.mxu0 %v819
    %1002 = vmatpush.bf16.msra.mxu0 %v817
    %1003 = vmatpush.bf16.msra.mxu0 %v815
    %1004 = vmatmul.bf16.gmra.mxu0 %v533
    %v1005 = vpop.f32.mrf.mxu0
    %v1006 = vadd.f32 %v992, %v1005
    %v1007 = vpop.f32.mrf.mxu0
    %v1008 = vadd.f32 %v994, %v1007
    %1009 = vdwg.mxu0
    %1010 = vmatpush.bf16.msra.mxu0 %v845
    %1011 = vmatpush.bf16.msra.mxu0 %v843
    %1012 = vmatpush.bf16.msra.mxu0 %v841
    %1013 = vmatpush.bf16.msra.mxu0 %v839
    %1014 = vmatpush.bf16.msra.mxu0 %v837
    %1015 = vmatpush.bf16.msra.mxu0 %v835
    %1016 = vmatpush.bf16.msra.mxu0 %v833
    %1017 = vmatpush.bf16.msra.mxu0 %v831
    %1018 = vmatmul.bf16.gmra.mxu0 %v534
    %v1019 = vpop.f32.mrf.mxu0
    %v1020 = vadd.f32 %v1006, %v1019
    %v1021 = vpop.f32.mrf.mxu0
    %v1022 = vadd.f32 %v1008, %v1021
    %1023 = vdwg.mxu0
    %1024 = vmatpush.bf16.msra.mxu0 %v861
    %1025 = vmatpush.bf16.msra.mxu0 %v859
    %1026 = vmatpush.bf16.msra.mxu0 %v857
    %1027 = vmatpush.bf16.msra.mxu0 %v855
    %1028 = vmatpush.bf16.msra.mxu0 %v853
    %1029 = vmatpush.bf16.msra.mxu0 %v851
    %1030 = vmatpush.bf16.msra.mxu0 %v849
    %1031 = vmatpush.bf16.msra.mxu0 %v847
    %1032 = vmatmul.bf16.gmra.mxu0 %v535
    %v1033 = vpop.f32.mrf.mxu0
    %v1034 = vadd.f32 %v1020, %v1033
    %v1035 = vpop.f32.mrf.mxu0
    %v1036 = vadd.f32 %v1022, %v1035
    %1037 = vdwg.mxu0
    %v1038 = vmax.f32 %v978, 0.0
    %v1039 = vmax.f32 %v1034, 0.0
    %v1040 = vmax.f32 %v980, 0.0
    %v1041 = vmax.f32 %v1036, 0.0
    %v1042 = vpack.c.bf16 %v1040, %v1038
    %v1043 = vpack.c.bf16 %v1041, %v1039
    %v1044 = vld [vmem:[#allocation6] sm:$0xf]
    %v1045 = vld [vmem:[#allocation6 + $0x4] sm:$0xf]
    %v1046 = vld [vmem:[#allocation6 + $0x8] sm:$0xf]
    %v1047 = vld [vmem:[#allocation6 + $0xc] sm:$0xf]
    %v1048 = vld [vmem:[#allocation6 + $0x10] sm:$0xf]
    %v1049 = vld [vmem:[#allocation6 + $0x14] sm:$0xf]
    %v1050 = vld [vmem:[#allocation6 + $0x18] sm:$0xf]
    %v1051 = vld [vmem:[#allocation6 + $0x1c] sm:$0xf]
    %v1052 = vld [vmem:[#allocation6 + $0x20] sm:$0xf]
    %v1053 = vld [vmem:[#allocation6 + $0x24] sm:$0xf]
    %v1054 = vld [vmem:[#allocation6 + $0x28] sm:$0xf]
    %v1055 = vld [vmem:[#allocation6 + $0x2c] sm:$0xf]
    %v1056 = vld [vmem:[#allocation6 + $0x30] sm:$0xf]
    %v1057 = vld [vmem:[#allocation6 + $0x34] sm:$0xf]
    %v1058 = vld [vmem:[#allocation6 + $0x38] sm:$0xf]
    %v1059 = vld [vmem:[#allocation6 + $0x3c] sm:$0xf]
    %v1060 = vld [vmem:[#allocation6 + $0x40] sm:$0xf]
    %v1061 = vld [vmem:[#allocation6 + $0x44] sm:$0xf]
    %v1062 = vld [vmem:[#allocation6 + $0x48] sm:$0xf]
    %v1063 = vld [vmem:[#allocation6 + $0x4c] sm:$0xf]
    %v1064 = vld [vmem:[#allocation6 + $0x50] sm:$0xf]
    %v1065 = vld [vmem:[#allocation6 + $0x54] sm:$0xf]
    %v1066 = vld [vmem:[#allocation6 + $0x58] sm:$0xf]
    %v1067 = vld [vmem:[#allocation6 + $0x5c] sm:$0xf]
    %v1068 = vld [vmem:[#allocation6 + $0x60] sm:$0xf]
    %v1069 = vld [vmem:[#allocation6 + $0x64] sm:$0xf]
    %v1070 = vld [vmem:[#allocation6 + $0x68] sm:$0xf]
    %v1071 = vld [vmem:[#allocation6 + $0x6c] sm:$0xf]
    %v1072 = vld [vmem:[#allocation6 + $0x70] sm:$0xf]
    %v1073 = vld [vmem:[#allocation6 + $0x74] sm:$0xf]
    %v1074 = vld [vmem:[#allocation6 + $0x78] sm:$0xf]
    %v1075 = vld [vmem:[#allocation6 + $0x7c] sm:$0xf]
    %v1076 = vld [vmem:[%s6] sm:$0x1]
    %v1078 = vperm.slane %v1076, 0
    %v1112 = vunpack.c.l.b16 %v1044
    %v1113 = vunpack.c.l.b16 %v1045
    %v1114 = vunpack.c.l.b16 %v1046
    %v1115 = vunpack.c.l.b16 %v1047
    %v1116 = vunpack.c.l.b16 %v1048
    %v1117 = vunpack.c.l.b16 %v1049
    %v1118 = vunpack.c.l.b16 %v1050
    %v1119 = vunpack.c.l.b16 %v1051
    %v1120 = vunpack.c.l.b16 %v1052
    %v1121 = vunpack.c.l.b16 %v1053
    %v1122 = vunpack.c.l.b16 %v1054
    %v1123 = vunpack.c.l.b16 %v1055
    %v1124 = vunpack.c.l.b16 %v1056
    %v1125 = vunpack.c.l.b16 %v1057
    %v1126 = vunpack.c.l.b16 %v1058
    %v1127 = vunpack.c.l.b16 %v1059
    %v1128 = vunpack.c.l.b16 %v1060
    %v1129 = vunpack.c.l.b16 %v1061
    %v1130 = vunpack.c.l.b16 %v1062
    %v1131 = vunpack.c.l.b16 %v1063
    %v1132 = vunpack.c.l.b16 %v1064
    %v1133 = vunpack.c.l.b16 %v1065
    %v1134 = vunpack.c.l.b16 %v1066
    %v1135 = vunpack.c.l.b16 %v1067
    %v1136 = vunpack.c.l.b16 %v1068
    %v1137 = vunpack.c.l.b16 %v1069
    %v1138 = vunpack.c.l.b16 %v1070
    %v1139 = vunpack.c.l.b16 %v1071
    %v1140 = vunpack.c.l.b16 %v1072
    %v1141 = vunpack.c.l.b16 %v1073
    %v1142 = vunpack.c.l.b16 %v1074
    %v1143 = vunpack.c.l.b16 %v1075
    %v1144 = vpack.c.b16 %v1113, %v1112
    %v1145 = vpack.c.b16 %v1115, %v1114
    %v1146 = vpack.c.b16 %v1117, %v1116
    %v1147 = vpack.c.b16 %v1119, %v1118
    %v1148 = vpack.c.b16 %v1121, %v1120
    %v1149 = vpack.c.b16 %v1123, %v1122
    %v1150 = vpack.c.b16 %v1125, %v1124
    %v1151 = vpack.c.b16 %v1127, %v1126
    %v1152 = vpack.c.b16 %v1129, %v1128
    %v1153 = vpack.c.b16 %v1131, %v1130
    %v1154 = vpack.c.b16 %v1133, %v1132
    %v1155 = vpack.c.b16 %v1135, %v1134
    %v1156 = vpack.c.b16 %v1137, %v1136
    %v1157 = vpack.c.b16 %v1139, %v1138
    %v1158 = vpack.c.b16 %v1141, %v1140
    %v1159 = vpack.c.b16 %v1143, %v1142
    %1176 = vmatpush.bf16.msra.mxu0 %v1151
    %1177 = vmatpush.bf16.msra.mxu0 %v1150
    %1178 = vmatpush.bf16.msra.mxu0 %v1149
    %1179 = vmatpush.bf16.msra.mxu0 %v1148
    %1180 = vmatpush.bf16.msra.mxu0 %v1147
    %1181 = vmatpush.bf16.msra.mxu0 %v1146
    %1182 = vmatpush.bf16.msra.mxu0 %v1145
    %1183 = vmatpush.bf16.msra.mxu0 %v1144
    %1184 = vmatmul.bf16.gmra.mxu0 %v1042
    %v1185 = vpop.f32.mrf.mxu0
    %v1186 = vadd.f32 %v1078, %v1185
    %v1187 = vpop.f32.mrf.mxu0
    %v1188 = vadd.f32 %v1078, %v1187
    %1189 = vdwg.mxu0
    %1190 = vmatpush.bf16.msra.mxu0 %v1159
    %1191 = vmatpush.bf16.msra.mxu0 %v1158
    %1192 = vmatpush.bf16.msra.mxu0 %v1157
    %1193 = vmatpush.bf16.msra.mxu0 %v1156
    %1194 = vmatpush.bf16.msra.mxu0 %v1155
    %1195 = vmatpush.bf16.msra.mxu0 %v1154
    %1196 = vmatpush.bf16.msra.mxu0 %v1153
    %1197 = vmatpush.bf16.msra.mxu0 %v1152
    %1198 = vmatmul.bf16.gmra.mxu0 %v1043
    %v1199 = vpop.f32.mrf.mxu0
    %v1200 = vadd.f32 %v1186, %v1199
    %v1201 = vpop.f32.mrf.mxu0
    %v1202 = vadd.f32 %v1188, %v1201
    %1203 = vdwg.mxu0
    %1204 = vst [vmem:[%s7] sm:$0xff] %v1200
    %1205 = vst [vmem:[%s7 + $0x8] sm:$0xff] %v1202
    // Predicated region
    $region42: #{encoder_forward.1} parent=1 // pred_check
      _
    $region43: #{encoder_forward.1} parent=1 // pred_check_branch
      %1207 = sbr.rel (0) target = $region45
    $region44: #{encoder_forward.1} parent=1 // pred_region
      _
    $region45: #{encoder_forward.1} parent=1 // pred_fallthru
      _
    // Predicated region
    $region46: #{encoder_forward.1} parent=1 // pred_check
      _
    $region47: #{encoder_forward.1} parent=1 // pred_check_branch
      %1209 = sbr.rel (0) target = $region49
    $region48: #{encoder_forward.1} parent=1 // pred_region
      _
    $region49: #{encoder_forward.1} parent=1 // pred_fallthru
      _
    %1210 = vsyncpa [#allocation3], 1
    %1211 = vsyncpa [#allocation5], 1

</llo_original>
